<compile_context>
chip_gen: v7x
topology: tpu7x:2x2x1
jax: 0.10.0
libtpu: 0.0.40
codegen_flags: <defaults>
</compile_context>

<pallas_src>
import functools

import jax
import jax.numpy as jnp
import numpy as np
from jax.experimental import pallas as pl
from jax.experimental.pallas import tpu as pltpu


def _round_up(x, m):
    return ((x + m - 1) // m) * m


def _vmem_capacity_bytes():
    """Physical VMEM per TensorCore; conservative 64 MiB fallback."""
    try:
        return int(pltpu.get_tpu_info().vmem_capacity_bytes)
    except Exception:
        return 64 * 1024 * 1024


def _linear_kernel(x_ref, w_ref, b_ref, o_ref, *, apply_tanh):
    # (tm, K) @ (K, tn) on the MXU with f32 accumulation; bias (+ tanh) in f32.
    acc = jnp.dot(x_ref[...], w_ref[...], preferred_element_type=jnp.float32)
    acc = acc + b_ref[...]
    if apply_tanh:
        acc = jnp.tanh(acc)
    o_ref[...] = acc.astype(o_ref.dtype)


def _linear_pallas(x, w, b, *, apply_tanh, out_dtype):
    """out = act(x @ w + b).

    x: (N, K)  compute-dtype (rows padded internally to a multiple of 16)
    w: (K, M)  compute-dtype, M % 128 == 0 (pre-padded once at init)
    b: (1, M)  float32
    Returns (N_pad, M) in out_dtype; caller slices rows (and logical columns).
    """
    n, k = x.shape
    k_w, m = w.shape
    assert k_w == k and m % 128 == 0 and b.shape == (1, m)

    cap = _vmem_capacity_bytes()
    budget = int(cap * 0.75)             # leave headroom for Mosaic-internal scratch
    big_vmem = cap >= (100 << 20)        # v5e / v6e (128 MiB) vs v7x (64 MiB)
    tm_cap = 2048 if big_vmem else 1024  # keep all tokens in ONE row block -> W read once
    tn_cap = 2048 if big_vmem else 1024  # larger weight-column DMAs where VMEM allows

    # One big token block (all B*L tokens), padded for sublane layout.
    tm = min(_round_up(n, 16), tm_cap)
    n_pad = _round_up(n, tm)

    out_itemsize = jnp.dtype(out_dtype).itemsize

    def tile_bytes(t_n):
        return (2 * tm * k * x.dtype.itemsize        # double-buffered x tiles
                + 2 * k * t_n * w.dtype.itemsize     # double-buffered weight tiles
                + 2 * t_n * 4                        # bias tiles (f32)
                + 2 * tm * t_n * out_itemsize)       # output tiles

    # Largest lane-dense column tile that divides M (no output padding/slicing)
    # and fits the per-generation VMEM budget.
    tn = 128
    cand = 256
    while cand <= min(tn_cap, m):
        if m % cand == 0 and tile_bytes(cand) <= budget:
            tn = cand
        cand += 128

    # Row padding of x only (tokens are tiny: N x K in bf16).
    x_p = x if n_pad == n else jnp.pad(x, ((0, n_pad - n), (0, 0)))

    grid = (n_pad // tm, m // tn)
    vmem_limit = max(32 * 1024 * 1024, min(budget, int(tile_bytes(tn) * 1.5)))

    return pl.pallas_call(
        functools.partial(_linear_kernel, apply_tanh=apply_tanh),
        out_shape=jax.ShapeDtypeStruct((n_pad, m), out_dtype),
        grid_spec=pltpu.PrefetchScalarGridSpec(
            num_scalar_prefetch=0,
            grid=grid,
            in_specs=[
                pl.BlockSpec((tm, k), lambda i, j: (i, 0)),   # token block, full K
                pl.BlockSpec((k, tn), lambda i, j: (0, j)),   # streamed weight cols
                pl.BlockSpec((1, tn), lambda i, j: (0, j)),   # bias slice
            ],
            out_specs=pl.BlockSpec((tm, tn), lambda i, j: (i, j)),
        ),
        compiler_params=pltpu.CompilerParams(
            # Both axes independent -> v7x's two TensorCores split the HBM-bound
            # weight stream; harmless on single-core v5e/v6e.
            dimension_semantics=("parallel", "parallel"),
            vmem_limit_bytes=vmem_limit,
        ),
    )(x_p, w, b)


@functools.partial(jax.jit, static_argnames=("prefix_projection",))
def prefix_encoder_forward(prefix, params, prefix_projection):
    """prefix: int32[B, L] of ids in [0, pre_seq_len). Returns f32[B, L, out_dim]."""
    b, l = prefix.shape
    if not prefix_projection:
        # Pure embedding gather -> no matmul, no kernel needed.
        tokens = jnp.take(params["embedding"], prefix.reshape(-1), axis=0)
        return tokens.reshape(b, l, -1)

    kp = params["kernel"]
    out_dim = params["b2"].shape[0]      # logical (unpadded) output width, static
    n = b * l

    # TODO(synk): the row gather could be fused into kernel 1 via
    # PrefetchScalarGridSpec(num_scalar_prefetch=1) + pl.Element row indexing;
    # it only moves N*hidden bytes, so it stays as a plain XLA gather here.
    tokens = jnp.take(params["embedding"], prefix.reshape(-1), axis=0)
    x = tokens.astype(kp["w1"].dtype)    # tiny N x K cast; weights are never re-cast

    # h = tanh(x @ W1 + b1)   (bf16 result -> cheap HBM round trip to kernel 2)
    h = _linear_pallas(x, kp["w1"], kp["b1"], apply_tanh=True, out_dtype=jnp.bfloat16)
    # out = h @ W2 + b2       (W2 streamed from HBM exactly once, column tiles)
    # Output stays f32 to match the PyTorch module; use bf16 here if the
    # consumer (past_key_values) is bf16 to halve the output write traffic.
    out = _linear_pallas(h, kp["w2"], kp["b2"], apply_tanh=False, out_dtype=jnp.float32)

    # Padded token rows / padded output columns carry garbage from the pad path
    # and MUST be sliced off here (for lane-multiple out_dim this is row-only).
    return out[:n, :out_dim].reshape(b, l, -1)


def make_prefix_encoder_params(config, key, compute_dtype=jnp.bfloat16):
    """Deterministic synthetic parameters matching PrefixEncoder.__init__ shapes.

    Kernel-ready weights are padded to lane multiples and cast to `compute_dtype`
    ONCE here (never per forward call).  The f32 copies are kept only for the
    reference check; a production module would store only params["kernel"].
    """
    hidden = config["hidden_size"]
    heads = config["num_attention_heads"]
    layers = config["num_hidden_layers"]
    pre_seq_len = config["pre_seq_len"]
    shape_4 = hidden // heads
    if config.get("multi_query_group_num") is not None:
        embed_size = config["multi_query_group_num"] * shape_4
    else:
        embed_size = hidden
    out_dim = layers * embed_size * 2

    keys = jax.random.split(key, 5)
    if not config["prefix_projection"]:
        emb = jax.random.normal(keys[0], (pre_seq_len, out_dim), jnp.float32) * 0.02
        return {"embedding": emb}, out_dim

    emb = jax.random.normal(keys[0], (pre_seq_len, hidden), jnp.float32) * 0.02
    w1 = jax.random.normal(keys[1], (hidden, hidden), jnp.float32) * 0.02
    b1 = jax.random.normal(keys[2], (hidden,), jnp.float32) * 0.02
    w2 = jax.random.normal(keys[3], (hidden, out_dim), jnp.float32) * 0.02
    b2 = jax.random.normal(keys[4], (out_dim,), jnp.float32) * 0.02

    # Pad W1 columns / b1 and W2 rows+columns / b2 to multiples of 128 lanes.
    # Padded h columns are exactly tanh(0 + 0) = 0 and padded W2 rows are 0,
    # so the logical result is unchanged.
    h_pad = _round_up(hidden, 128)
    o_pad = _round_up(out_dim, 128)
    w1_k = jnp.pad(w1, ((0, 0), (0, h_pad - hidden))).astype(compute_dtype)
    b1_k = jnp.pad(b1, ((0, h_pad - hidden),)).reshape(1, h_pad).astype(jnp.float32)
    w2_k = jnp.pad(w2, ((0, h_pad - hidden), (0, o_pad - out_dim))).astype(compute_dtype)
    b2_k = jnp.pad(b2, ((0, o_pad - out_dim),)).reshape(1, o_pad).astype(jnp.float32)

    params = {
        "embedding": emb,
        "w1": w1, "b1": b1, "w2": w2, "b2": b2,             # f32, logical shapes
        "kernel": {"w1": w1_k, "b1": b1_k, "w2": w2_k, "b2": b2_k},
    }
    return params, out_dim


def _reference_forward(prefix, params, prefix_projection):
    """Plain-JAX reference mirroring the kernel's bf16 weight / f32 accumulation."""
    tokens = jnp.take(params["embedding"], prefix.reshape(-1), axis=0)
    if prefix_projection:
        x = tokens.astype(jnp.bfloat16)
        w1 = params["w1"].astype(jnp.bfloat16)
        w2 = params["w2"].astype(jnp.bfloat16)
        h = jnp.tanh(jnp.dot(x, w1, preferred_element_type=jnp.float32) + params["b1"])
        tokens = (jnp.dot(h.astype(jnp.bfloat16), w2,
                          preferred_element_type=jnp.float32) + params["b2"])
    return tokens.reshape(prefix.shape[0], prefix.shape[1], -1)


if __name__ == "__main__":
    config = dict(
        prefix_projection=True,
        pre_seq_len=8,
        hidden_size=32,
        num_attention_heads=4,
        num_hidden_layers=2,
        multi_query_group_num=None,
    )
    key = jax.random.PRNGKey(0)
    pkey, ikey = jax.random.split(key)
    params, out_dim = make_prefix_encoder_params(config, pkey)  # out_dim = 2*2*32 = 128

    batch, prefix_len = 2, config["pre_seq_len"]  # (2, 8) -> 16 tokens
    prefix = jax.random.randint(
        ikey, (batch, prefix_len), 0, config["pre_seq_len"], dtype=jnp.int32
    )

    # prefix_projection=True path (Pallas MLP).
    out = prefix_encoder_forward(prefix, params, prefix_projection=True)
    out = jax.block_until_ready(out)
    assert out.shape == (batch, prefix_len, out_dim), out.shape
    ref = _reference_forward(prefix, params, True)
    np.testing.assert_allclose(np.asarray(out), np.asarray(ref), rtol=2e-3, atol=2e-3)

    # prefix_projection=False path (pure embedding gather, no matmul -> no kernel).
    cfg_np = dict(config, prefix_projection=False)
    params_np, out_dim_np = make_prefix_encoder_params(cfg_np, pkey)
    out_np = prefix_encoder_forward(prefix, params_np, prefix_projection=False)
    out_np = jax.block_until_ready(out_np)
    assert out_np.shape == (batch, prefix_len, out_dim_np), out_np.shape
    ref_np = _reference_forward(prefix, params_np, False)
    np.testing.assert_allclose(np.asarray(out_np), np.asarray(ref_np), rtol=1e-6, atol=1e-6)

    print("KERNEL_OK")
</pallas_src>

<mosaic_0001>
module attributes {stable_mosaic.version = 11 : i64} {
  func.func @_linear_kernel(%arg0: i32, %arg1: i32, %arg2: memref<16x128xbf16, #tpu.memory_space<vmem>>, %arg3: memref<128x128xbf16, #tpu.memory_space<vmem>>, %arg4: memref<1x128xf32, #tpu.memory_space<vmem>>, %arg5: memref<16x128xf32, #tpu.memory_space<vmem>>) attributes {dimension_semantics = [#tpu.dimension_semantics<parallel>, #tpu.dimension_semantics<parallel>], iteration_bounds = array<i64: 1, 1>, scalar_prefetch = 0 : i64, scratch_operands = 0 : i64, tpu.core_type = #tpu.core_type<tc>, window_params = [{transform_indices = @transform_0, window_bounds = array<i64: 16, 128>}, {transform_indices = @transform_1, window_bounds = array<i64: 128, 128>}, {transform_indices = @transform_2, window_bounds = array<i64: 1, 128>}, {transform_indices = @transform_3, window_bounds = array<i64: 16, 128>}]} {
    %c0 = arith.constant 0 : index
    %c0_0 = arith.constant 0 : index
    %0 = vector.load %arg2[%c0, %c0_0] : memref<16x128xbf16, #tpu.memory_space<vmem>>, vector<16x128xbf16>
    %c0_1 = arith.constant 0 : index
    %c0_2 = arith.constant 0 : index
    %1 = vector.load %arg3[%c0_1, %c0_2] : memref<128x128xbf16, #tpu.memory_space<vmem>>, vector<128x128xbf16>
    %cst = arith.constant dense<0.000000e+00> : vector<16x128xf32>
    %2 = tpu.matmul %0, %1, %cst {dimension_numbers = #tpu.dot_dimension_numbers<[1], [0], [0], [1], [0, 0, 1, 1], [], []>} : vector<16x128xbf16>, vector<128x128xbf16>, vector<16x128xf32> -> vector<16x128xf32>
    %c0_3 = arith.constant 0 : index
    %c0_4 = arith.constant 0 : index
    %3 = vector.load %arg4[%c0_3, %c0_4] : memref<1x128xf32, #tpu.memory_space<vmem>>, vector<1x128xf32>
    %4 = vector.broadcast %3 : vector<1x128xf32> to vector<16x128xf32>
    %5 = arith.addf %2, %4 : vector<16x128xf32>
    %c0_5 = arith.constant 0 : index
    %c0_6 = arith.constant 0 : index
    %6 = vector.load %arg5[%c0_5, %c0_6] : memref<16x128xf32, #tpu.memory_space<vmem>>, vector<16x128xf32>
    tpu.vector_store %arg5[%c0_5, %c0_6], %5 {strides = array<i32>} : memref<16x128xf32, #tpu.memory_space<vmem>>, vector<16x128xf32>,
    return
  }
  func.func @transform_0(%arg0: i32, %arg1: i32) -> (i32, i32) {
    %c0_i32 = arith.constant 0 : i32
    %c0_i32_0 = arith.constant 0 : i32
    return %arg0, %c0_i32 : i32, i32
  }
  func.func @transform_1(%arg0: i32, %arg1: i32) -> (i32, i32) {
    %c0_i32 = arith.constant 0 : i32
    %c0_i32_0 = arith.constant 0 : i32
    return %c0_i32, %arg1 : i32, i32
  }
  func.func @transform_2(%arg0: i32, %arg1: i32) -> (i32, i32) {
    %c0_i32 = arith.constant 0 : i32
    %c0_i32_0 = arith.constant 0 : i32
    return %c0_i32, %arg1 : i32, i32
  }
  func.func @transform_3(%arg0: i32, %arg1: i32) -> (i32, i32) {
    %c0_i32 = arith.constant 0 : i32
    return %arg0, %arg1 : i32, i32
  }
}

module attributes {stable_mosaic.version = 11 : i64} {
  func.func @_linear_kernel(%arg0: i32, %arg1: i32, %arg2: memref<16x32xbf16, #tpu.memory_space<vmem>>, %arg3: memref<32x128xbf16, #tpu.memory_space<vmem>>, %arg4: memref<1x128xf32, #tpu.memory_space<vmem>>, %arg5: memref<16x128xbf16, #tpu.memory_space<vmem>>) attributes {dimension_semantics = [#tpu.dimension_semantics<parallel>, #tpu.dimension_semantics<parallel>], iteration_bounds = array<i64: 1, 1>, scalar_prefetch = 0 : i64, scratch_operands = 0 : i64, tpu.core_type = #tpu.core_type<tc>, window_params = [{transform_indices = @transform_0, window_bounds = array<i64: 16, 32>}, {transform_indices = @transform_1, window_bounds = array<i64: 32, 128>}, {transform_indices = @transform_2, window_bounds = array<i64: 1, 128>}, {transform_indices = @transform_3, window_bounds = array<i64: 16, 128>}]} {
    %c0 = arith.constant 0 : index
    %c0_0 = arith.constant 0 : index
    %0 = vector.load %arg2[%c0, %c0_0] : memref<16x32xbf16, #tpu.memory_space<vmem>>, vector<16x32xbf16>
    %c0_1 = arith.constant 0 : index
    %c0_2 = arith.constant 0 : index
    %1 = vector.load %arg3[%c0_1, %c0_2] : memref<32x128xbf16, #tpu.memory_space<vmem>>, vector<32x128xbf16>
    %cst = arith.constant dense<0.000000e+00> : vector<16x128xf32>
    %2 = tpu.matmul %0, %1, %cst {dimension_numbers = #tpu.dot_dimension_numbers<[1], [0], [0], [1], [0, 0, 1, 1], [], []>} : vector<16x32xbf16>, vector<32x128xbf16>, vector<16x128xf32> -> vector<16x128xf32>
    %c0_3 = arith.constant 0 : index
    %c0_4 = arith.constant 0 : index
    %3 = vector.load %arg4[%c0_3, %c0_4] : memref<1x128xf32, #tpu.memory_space<vmem>>, vector<1x128xf32>
    %4 = vector.broadcast %3 : vector<1x128xf32> to vector<16x128xf32>
    %5 = arith.addf %2, %4 : vector<16x128xf32>
    %6 = math.tanh %5 : vector<16x128xf32>
    %7 = arith.truncf %6 : vector<16x128xf32> to vector<16x128xbf16>
    %c0_5 = arith.constant 0 : index
    %c0_6 = arith.constant 0 : index
    %8 = vector.load %arg5[%c0_5, %c0_6] : memref<16x128xbf16, #tpu.memory_space<vmem>>, vector<16x128xbf16>
    tpu.vector_store %arg5[%c0_5, %c0_6], %7 {strides = array<i32>} : memref<16x128xbf16, #tpu.memory_space<vmem>>, vector<16x128xbf16>,
    return
  }
  func.func @transform_0(%arg0: i32, %arg1: i32) -> (i32, i32) {
    %c0_i32 = arith.constant 0 : i32
    %c0_i32_0 = arith.constant 0 : i32
    return %arg0, %c0_i32 : i32, i32
  }
  func.func @transform_1(%arg0: i32, %arg1: i32) -> (i32, i32) {
    %c0_i32 = arith.constant 0 : i32
    %c0_i32_0 = arith.constant 0 : i32
    return %c0_i32, %arg1 : i32, i32
  }
  func.func @transform_2(%arg0: i32, %arg1: i32) -> (i32, i32) {
    %c0_i32 = arith.constant 0 : i32
    %c0_i32_0 = arith.constant 0 : i32
    return %c0_i32, %arg1 : i32, i32
  }
  func.func @transform_3(%arg0: i32, %arg1: i32) -> (i32, i32) {
    %c0_i32 = arith.constant 0 : i32
    return %arg0, %arg1 : i32, i32
  }
}

</mosaic_0001>

<llo_original>
// kernel: prefix_encoder_forward.2
$region0: #{prefix_encoder_forward.2}
  #allocation0 [shape = 'u32[]', space=smem, size = 0x4, offset = 0x4, fixed_abs, tag = 'smem constant byte address 0x4 - core index']
  #allocation1 [shape = 'u32[144,128]{1,0:T(1,128)}', space=vmem, size = 0x12000, scoped, tag = 'internal scratch']
  %s0 = inlined_call_operand.vmem [shape: bf16[16,32], index: 0, kind: input, shape index: {}]
  %s1 = inlined_call_operand.vmem [shape: bf16[32,128], index: 1, kind: input, shape index: {}]
  %s2 = inlined_call_operand.vmem [shape: f32[1,128], index: 2, kind: input, shape index: {}]
  %s3 = inlined_call_operand.vmem [shape: bf16[16,128], index: 3, kind: output, shape index: {}]
  %s4 = sld [smem:[#allocation0]]
  $region22: #{prefix_encoder_forward.2} parent=0
    _
  %s6 = ssub.s32 1, %s4
  %s7 = scalar_select 0, %s6, %s4
  // Predicated region
  $region2: #{prefix_encoder_forward.2} parent=0 // pred_check
    _
  $region3: #{prefix_encoder_forward.2} parent=0 // pred_check_branch
    %9 = sbr.rel (0) target = $region5
  $region4: #{prefix_encoder_forward.2} parent=0 // pred_region
    _
  $region5: #{prefix_encoder_forward.2} parent=0 // pred_fallthru
    _
  // Predicated region
  $region6: #{prefix_encoder_forward.2} parent=0 // pred_check
    _
  $region7: #{prefix_encoder_forward.2} parent=0 // pred_check_branch
    %11 = sbr.rel (0) target = $region9
  $region8: #{prefix_encoder_forward.2} parent=0 // pred_region
    _
  $region9: #{prefix_encoder_forward.2} parent=0 // pred_fallthru
    _
  // Predicated region
  $region10: #{prefix_encoder_forward.2} parent=0 // pred_check
    _
  $region11: #{prefix_encoder_forward.2} parent=0 // pred_check_branch
    %13 = sbr.rel (0) target = $region13
  $region12: #{prefix_encoder_forward.2} parent=0 // pred_region
    _
  $region13: #{prefix_encoder_forward.2} parent=0 // pred_fallthru
    _
  %v15 = vld [vmem:[%s0] sm:$0xf]
  %v16 = vld [vmem:[%s0 + $0x4] sm:$0xf]
  %v17 = vld [vmem:[%s1] sm:$0xf]
  %v18 = vld [vmem:[%s1 + $0x4] sm:$0xf]
  %v19 = vld [vmem:[%s1 + $0x8] sm:$0xf]
  %v20 = vld [vmem:[%s1 + $0xc] sm:$0xf]
  %v21 = vld [vmem:[%s2] sm:$0x1]
  %v23 = vlaneseq
  %v24 = vshrl.u32 %v23, 7
  %v25 = vsub.s32 0, %v24
  %v26 = vrot.slane %v21, %v25
  %v30 = vunpack.c.l.b16 %v15
  %v31 = vunpack.c.l.b16 %v16
  %v32 = vpack.c.b16 %v31, %v30
  %v37 = vunpack.c.l.b16 %v17
  %v38 = vunpack.c.l.b16 %v18
  %v39 = vunpack.c.l.b16 %v19
  %v40 = vunpack.c.l.b16 %v20
  %v41 = vpack.c.b16 %v38, %v37
  %v42 = vpack.c.b16 %v40, %v39
  %vm45 = vcmask 261120
  %v47 = vsel %vm45, %v32, 0
  %49 = vmatprep.subr.bf16.mxu0 0
  %50 = vmatpush1.bf16.msra.mxu0 %v41
  %51 = vmatprep.subr.bf16.mxu0 0
  %52 = vmatpush1.bf16.msra.mxu0 %v42
  %53 = vmatprep.subr.bf16.mxu0 0
  %54 = vmatpush1.bf16.msra.mxu0 0
  %55 = vmatprep.subr.bf16.mxu0 0
  %56 = vmatpush1.bf16.msra.mxu0 0
  %57 = vmatprep.subr.bf16.mxu0 0
  %58 = vmatpush1.bf16.msra.mxu0 0
  %59 = vmatprep.subr.bf16.mxu0 0
  %60 = vmatpush1.bf16.msra.mxu0 0
  %61 = vmatprep.subr.bf16.mxu0 0
  %62 = vmatpush1.bf16.msra.mxu0 0
  %63 = vmatprep.subr.bf16.mxu0 0
  %64 = vmatpush1.bf16.msra.mxu0 0
  %65 = vmatprep.subr.bf16.mxu0 0
  %66 = vmatpush1.bf16.msra.mxu0 0
  %67 = vmatprep.subr.bf16.mxu0 0
  %68 = vmatpush1.bf16.msra.mxu0 0
  %69 = vmatprep.subr.bf16.mxu0 0
  %70 = vmatpush1.bf16.msra.mxu0 0
  %71 = vmatprep.subr.bf16.mxu0 0
  %72 = vmatpush1.bf16.msra.mxu0 0
  %73 = vmatprep.subr.bf16.mxu0 0
  %74 = vmatpush1.bf16.msra.mxu0 0
  %75 = vmatprep.subr.bf16.mxu0 0
  %76 = vmatpush1.bf16.msra.mxu0 0
  %77 = vmatprep.subr.bf16.mxu0 0
  %78 = vmatpush1.bf16.msra.mxu0 0
  %79 = vmatprep.subr.bf16.mxu0 0
  %80 = vmatpush1.bf16.msra.mxu0 0
  %81 = vmatprep.mubr.bf16.mxu0 0
  %82 = vmatmul.mubr.bf16.gmra.mrb[0].mxu0 %v47
  %v83 = vpop.f32.mrb[0].mxu0
  %v84 = vadd.f32 %v26, %v83
  %v85 = vpop.f32.mrb[0].mxu0
  %v86 = vpop.f32.mrb[0].mxu0
  %v87 = vadd.f32 %v26, %v86
  %v88 = vpop.f32.mrb[0].mxu0
  %89 = vdwg.mxu0
  %v90 = vtanh.pop %v84
  %v91 = vtanh.pop %v87
  %v92 = vpack.c.bf16 %v91, %v90
  %v94 = vunpack.c.l.b16 %v92
  %v95 = vunpack.c.h.b16 %v92
  %v96 = vpack.c.b16 %v94, %v94
  %v97 = vpack.c.b16 %v95, %v95
  %100 = vst [vmem:[%s3] sm:$0xf] %v96
  %101 = vst [vmem:[%s3 + $0x4] sm:$0xf] %v97
  // Predicated region
  $region14: #{prefix_encoder_forward.2} parent=0 // pred_check
    _
  $region15: #{prefix_encoder_forward.2} parent=0 // pred_check_branch
    %103 = sbr.rel (0) target = $region17
  $region16: #{prefix_encoder_forward.2} parent=0 // pred_region
    _
  $region17: #{prefix_encoder_forward.2} parent=0 // pred_fallthru
    _
  // Predicated region
  $region18: #{prefix_encoder_forward.2} parent=0 // pred_check
    _
  $region19: #{prefix_encoder_forward.2} parent=0 // pred_check_branch
    %105 = sbr.rel (0) target = $region21
  $region20: #{prefix_encoder_forward.2} parent=0 // pred_region
    _
  $region21: #{prefix_encoder_forward.2} parent=0 // pred_fallthru
    _

// kernel: prefix_encoder_forward.3
$region0: #{prefix_encoder_forward.3}
  #allocation0 [shape = 'u32[]', space=smem, size = 0x4, offset = 0x4, fixed_abs, tag = 'smem constant byte address 0x4 - core index']
  #allocation1 [shape = 'u32[144,128]{1,0:T(1,128)}', space=vmem, size = 0x12000, scoped, tag = 'internal scratch']
  %s0 = inlined_call_operand.vmem [shape: bf16[16,128], index: 0, kind: input, shape index: {}]
  %s1 = inlined_call_operand.vmem [shape: bf16[128,128], index: 1, kind: input, shape index: {}]
  %s2 = inlined_call_operand.vmem [shape: f32[1,128], index: 2, kind: input, shape index: {}]
  %s3 = inlined_call_operand.hbm [shape: f32[16,128], index: 3, kind: output, shape index: {}]
  %s4 = sld [smem:[#allocation0]]
  $region22: #{prefix_encoder_forward.3} parent=0
    _
  %s6 = ssub.s32 1, %s4
  %s7 = scalar_select 0, %s6, %s4
  $region1: #{prefix_encoder_forward.3} parent=0
    #allocation2 [shape = 'u8[8192]{0}', space=vmem, size = 0x2000, scoped, tag = 'output window, operand 0, single buffered']
    #allocation3 [shape = 's32[1]{0}', space=sflag, size = 0x4, scoped, tag = 'scoped memory for prefix_encoder_forward.3']
    %8 = vsyncpa [#allocation3], 0
    // Predicated region
    $region2: #{prefix_encoder_forward.3} parent=1 // pred_check
      _
    $region3: #{prefix_encoder_forward.3} parent=1 // pred_check_branch
      %10 = sbr.rel (0) target = $region5
    $region4: #{prefix_encoder_forward.3} parent=1 // pred_region
      _
    $region5: #{prefix_encoder_forward.3} parent=1 // pred_fallthru
      _
    // Predicated region
    $region6: #{prefix_encoder_forward.3} parent=1 // pred_check
      _
    $region7: #{prefix_encoder_forward.3} parent=1 // pred_check_branch
      %12 = sbr.rel (0) target = $region9
    $region8: #{prefix_encoder_forward.3} parent=1 // pred_region
      _
    $region9: #{prefix_encoder_forward.3} parent=1 // pred_fallthru
      _
    // Predicated region
    $region10: #{prefix_encoder_forward.3} parent=1 // pred_check
      _
    $region11: #{prefix_encoder_forward.3} parent=1 // pred_check_branch
      %14 = sbr.rel (0) target = $region13
    $region12: #{prefix_encoder_forward.3} parent=1 // pred_region
      _
    $region13: #{prefix_encoder_forward.3} parent=1 // pred_fallthru
      _
    %v16 = vld [vmem:[%s0] sm:$0xf]
    %v17 = vld [vmem:[%s0 + $0x4] sm:$0xf]
    %v18 = vld [vmem:[%s1] sm:$0xf]
    %v19 = vld [vmem:[%s1 + $0x4] sm:$0xf]
    %v20 = vld [vmem:[%s1 + $0x8] sm:$0xf]
    %v21 = vld [vmem:[%s1 + $0xc] sm:$0xf]
    %v22 = vld [vmem:[%s1 + $0x10] sm:$0xf]
    %v23 = vld [vmem:[%s1 + $0x14] sm:$0xf]
    %v24 = vld [vmem:[%s1 + $0x18] sm:$0xf]
    %v25 = vld [vmem:[%s1 + $0x1c] sm:$0xf]
    %v26 = vld [vmem:[%s1 + $0x20] sm:$0xf]
    %v27 = vld [vmem:[%s1 + $0x24] sm:$0xf]
    %v28 = vld [vmem:[%s1 + $0x28] sm:$0xf]
    %v29 = vld [vmem:[%s1 + $0x2c] sm:$0xf]
    %v30 = vld [vmem:[%s1 + $0x30] sm:$0xf]
    %v31 = vld [vmem:[%s1 + $0x34] sm:$0xf]
    %v32 = vld [vmem:[%s1 + $0x38] sm:$0xf]
    %v33 = vld [vmem:[%s1 + $0x3c] sm:$0xf]
    %v34 = vld [vmem:[%s2] sm:$0x1]
    %v36 = vlaneseq
    %v37 = vshrl.u32 %v36, 7
    %v38 = vsub.s32 0, %v37
    %v39 = vrot.slane %v34, %v38
    %v43 = vunpack.c.l.b16 %v16
    %v44 = vunpack.c.l.b16 %v17
    %v45 = vpack.c.b16 %v44, %v43
    %v63 = vunpack.c.l.b16 %v18
    %v64 = vunpack.c.l.b16 %v19
    %v65 = vunpack.c.l.b16 %v20
    %v66 = vunpack.c.l.b16 %v21
    %v67 = vunpack.c.l.b16 %v22
    %v68 = vunpack.c.l.b16 %v23
    %v69 = vunpack.c.l.b16 %v24
    %v70 = vunpack.c.l.b16 %v25
    %v71 = vunpack.c.l.b16 %v26
    %v72 = vunpack.c.l.b16 %v27
    %v73 = vunpack.c.l.b16 %v28
    %v74 = vunpack.c.l.b16 %v29
    %v75 = vunpack.c.l.b16 %v30
    %v76 = vunpack.c.l.b16 %v31
    %v77 = vunpack.c.l.b16 %v32
    %v78 = vunpack.c.l.b16 %v33
    %v79 = vpack.c.b16 %v64, %v63
    %v80 = vpack.c.b16 %v66, %v65
    %v81 = vpack.c.b16 %v68, %v67
    %v82 = vpack.c.b16 %v70, %v69
    %v83 = vpack.c.b16 %v72, %v71
    %v84 = vpack.c.b16 %v74, %v73
    %v85 = vpack.c.b16 %v76, %v75
    %v86 = vpack.c.b16 %v78, %v77
    %95 = vmatprep.subr.bf16.mxu0 0
    %96 = vmatpush1.bf16.msra.mxu0 %v79
    %97 = vmatprep.subr.bf16.mxu0 0
    %98 = vmatpush1.bf16.msra.mxu0 %v80
    %99 = vmatprep.subr.bf16.mxu0 0
    %100 = vmatpush1.bf16.msra.mxu0 %v81
    %101 = vmatprep.subr.bf16.mxu0 0
    %102 = vmatpush1.bf16.msra.mxu0 %v82
    %103 = vmatprep.subr.bf16.mxu0 0
    %104 = vmatpush1.bf16.msra.mxu0 %v83
    %105 = vmatprep.subr.bf16.mxu0 0
    %106 = vmatpush1.bf16.msra.mxu0 %v84
    %107 = vmatprep.subr.bf16.mxu0 0
    %108 = vmatpush1.bf16.msra.mxu0 %v85
    %109 = vmatprep.subr.bf16.mxu0 0
    %110 = vmatpush1.bf16.msra.mxu0 %v86
    %111 = vmatprep.subr.bf16.mxu0 0
    %112 = vmatpush1.bf16.msra.mxu0 0
    %113 = vmatprep.subr.bf16.mxu0 0
    %114 = vmatpush1.bf16.msra.mxu0 0
    %115 = vmatprep.subr.bf16.mxu0 0
    %116 = vmatpush1.bf16.msra.mxu0 0
    %117 = vmatprep.subr.bf16.mxu0 0
    %118 = vmatpush1.bf16.msra.mxu0 0
    %119 = vmatprep.subr.bf16.mxu0 0
    %120 = vmatpush1.bf16.msra.mxu0 0
    %121 = vmatprep.subr.bf16.mxu0 0
    %122 = vmatpush1.bf16.msra.mxu0 0
    %123 = vmatprep.subr.bf16.mxu0 0
    %124 = vmatpush1.bf16.msra.mxu0 0
    %125 = vmatprep.subr.bf16.mxu0 0
    %126 = vmatpush1.bf16.msra.mxu0 0
    %127 = vmatprep.mubr.bf16.mxu0 0
    %128 = vmatmul.mubr.bf16.gmra.mrb[0].mxu0 %v45
    %v129 = vpop.f32.mrb[0].mxu0
    %v130 = vadd.f32 %v39, %v129
    %v131 = vpop.f32.mrb[0].mxu0
    %v132 = vpop.f32.mrb[0].mxu0
    %v133 = vadd.f32 %v39, %v132
    %v134 = vpop.f32.mrb[0].mxu0
    %135 = vdwg.mxu0
    %136 = vst [vmem:[#allocation2] sm:$0xff] %v130
    %137 = vst [vmem:[#allocation2 + $0x8] sm:$0xff] %v133
    // Predicated region
    $region14: #{prefix_encoder_forward.3} parent=1 // pred_check
      _
    $region15: #{prefix_encoder_forward.3} parent=1 // pred_check_branch
      %139 = sbr.rel (0) target = $region17
    $region16: #{prefix_encoder_forward.3} parent=1 // pred_region
      %s141 = ssub.s32 256, 256
      %142 = vsyncadd [#allocation3], %s141
      %s143 = sshll.u32 [#allocation2], 4
      %s144 = int_to_ptr.vmem [resolvable:$true] %s143
      %149 = dma.vmem_to_hbm [thread:$0]  %s144, 256, %s3, [#allocation3], 128, 128, 8
    $region17: #{prefix_encoder_forward.3} parent=1 // pred_fallthru
      _
    // Predicated region
    $region18: #{prefix_encoder_forward.3} parent=1 // pred_check
      _
    $region19: #{prefix_encoder_forward.3} parent=1 // pred_check_branch
      %151 = sbr.rel (0) target = $region21
    $region20: #{prefix_encoder_forward.3} parent=1 // pred_region
      %152 = dma.done [#allocation3], 256
    $region21: #{prefix_encoder_forward.3} parent=1 // pred_fallthru
      _
    %153 = vsyncpa [#allocation3], 1

</llo_original>
